<compile_context>
chip_gen: v7x
topology: tpu7x:2x2x1
jax: 0.10.0
libtpu: 0.0.40
codegen_flags: <defaults>
</compile_context>

<pallas_src>
import functools

import jax
import jax.numpy as jnp
from jax.experimental import pallas as pl
from jax.experimental.pallas import tpu as pltpu

LN_EPS = 1e-5


def _round_up(x, m):
    return (x + m - 1) // m * m


def _sublane_align(dtype):
    # Second-to-last block dim must be a multiple of this (packed sublanes).
    return {4: 8, 2: 16, 1: 32}[jnp.dtype(dtype).itemsize]


def _layer_norm(z):
    # One-pass LayerNorm over last axis, no affine (elementwise_affine=False).
    mean = jnp.mean(z, axis=-1, keepdims=True)
    ms = jnp.mean(z * z, axis=-1, keepdims=True)
    var = jnp.maximum(ms - mean * mean, 0.0)
    return (z - mean) * jax.lax.rsqrt(var + LN_EPS)


def ffn_kernel(x_ref, w1_ref, b1_ref, w2_ref, b2_ref, o_ref, acc_ref, *, pre_norm):
    k = pl.program_id(1)

    @pl.when(k == 0)
    def _():
        acc_ref[...] = jnp.zeros_like(acc_ref)

    x = x_ref[...]                                   # [TM, d_model], input dtype
    if pre_norm:
        ffn_in = _layer_norm(x.astype(jnp.float32)).astype(x.dtype)
    else:
        ffn_in = x

    # Linear 1 chunk + ReLU (Dropout = identity at inference).
    # MXU operands stay in the input/weight dtype; accumulate in f32.
    h = jnp.dot(ffn_in, w1_ref[...], preferred_element_type=jnp.float32)
    h = jnp.maximum(h + b1_ref[...].astype(jnp.float32), 0.0)   # [TM, TK] f32

    # Linear 2 chunk, accumulated over the d_inner grid axis.
    acc_ref[...] += jnp.dot(h.astype(w2_ref.dtype), w2_ref[...],
                            preferred_element_type=jnp.float32)

    @pl.when(k == pl.num_programs(1) - 1)
    def _():
        xf = x_ref[...].astype(jnp.float32)
        core = acc_ref[...] + b2_ref[...].astype(jnp.float32)
        if pre_norm:
            out = core + xf
        else:
            out = _layer_norm(xf + core)
        o_ref[...] = out.astype(o_ref.dtype)


def positionwise_feed_forward(x, w1, b1, w2, b2, *, pre_norm=False,
                              tile_rows=None, tile_k=None):
    """x: [seq, batch, d_model]. w1: [d_model, d_inner], w2: [d_inner, d_model]."""
    seq, batch, d_model = x.shape
    d_inner = w1.shape[1]
    rows = seq * batch
    x2 = x.reshape(rows, d_model)

    align = _sublane_align(x.dtype)

    # --- row tile: many grid steps when possible, padded (no assert). ---
    if tile_rows is None:
        tile_rows = min(256, _round_up(rows, align))
    tile_rows = _round_up(int(tile_rows), align)
    rows_p = _round_up(rows, tile_rows)
    if rows_p != rows:
        x2 = jnp.pad(x2, ((0, rows_p - rows), (0, 0)))

    # --- d_inner tile: stream W1/W2 slabs; reduction axis on the grid. ---
    if tile_k is None:
        tile_k = d_inner if d_inner <= 512 else 512
    tile_k = int(tile_k)
    if tile_k != d_inner:
        assert tile_k % 128 == 0, "tile_k must be a multiple of 128 or == d_inner"
    d_inner_p = _round_up(d_inner, tile_k)
    if d_inner_p != d_inner:
        pad = d_inner_p - d_inner
        w1 = jnp.pad(w1, ((0, 0), (0, pad)))
        b1 = jnp.pad(b1, ((0, pad),))
        w2 = jnp.pad(w2, ((0, pad), (0, 0)))

    b1_2d = b1.reshape(1, d_inner_p)
    b2_2d = b2.reshape(1, d_model)

    n_row = rows_p // tile_rows
    n_k = d_inner_p // tile_k

    # --- VMEM budget: double-buffered tiles + f32 accumulator, with headroom. ---
    isz = jnp.dtype(x.dtype).itemsize
    wsz = jnp.dtype(w1.dtype).itemsize
    vmem_bytes = 2 * (tile_rows * d_model * isz        # x tile
                      + d_model * tile_k * wsz         # W1 slab
                      + tile_k * wsz                   # b1 slab
                      + tile_k * d_model * wsz         # W2 slab
                      + d_model * wsz                  # b2
                      + tile_rows * d_model * isz)     # out tile
    vmem_bytes += tile_rows * d_model * 4               # f32 accumulator scratch
    vmem_limit = int(min(max(vmem_bytes * 3 // 2, 16 << 20), 64 << 20))

    cost = pl.CostEstimate(
        flops=4 * rows_p * d_model * d_inner_p,          # two matmuls
        transcendentals=rows_p,                          # rsqrt per row
        bytes_accessed=(rows_p * d_model * isz * 2
                        + (d_model * d_inner_p * 2 + d_inner_p + d_model) * wsz))

    kernel = functools.partial(ffn_kernel, pre_norm=pre_norm)

    out = pl.pallas_call(
        kernel,
        out_shape=jax.ShapeDtypeStruct((rows_p, d_model), x.dtype),
        grid_spec=pltpu.PrefetchScalarGridSpec(
            num_scalar_prefetch=0,
            grid=(n_row, n_k),                            # reduction axis last
            in_specs=[
                pl.BlockSpec((tile_rows, d_model), lambda i, k: (i, 0)),  # x rows
                pl.BlockSpec((d_model, tile_k), lambda i, k: (0, k)),     # W1 slab
                pl.BlockSpec((1, tile_k), lambda i, k: (0, k)),           # b1 slab
                pl.BlockSpec((tile_k, d_model), lambda i, k: (k, 0)),     # W2 slab
                pl.BlockSpec((1, d_model), lambda i, k: (0, 0)),          # b2
            ],
            out_specs=pl.BlockSpec((tile_rows, d_model), lambda i, k: (i, 0)),
            scratch_shapes=[pltpu.VMEM((tile_rows, d_model), jnp.float32)],
        ),
        compiler_params=pltpu.CompilerParams(
            dimension_semantics=("parallel", "arbitrary"),
            vmem_limit_bytes=vmem_limit),
        cost_estimate=cost,
    )(x2, w1, b1_2d, w2, b2_2d)

    return out[:rows].reshape(seq, batch, d_model)


def ffn_reference(x, w1, b1, w2, b2, *, pre_norm=False):
    xf = x.astype(jnp.float32)
    ffn_in = _layer_norm(xf) if pre_norm else xf
    h = jnp.maximum(ffn_in.astype(x.dtype) @ w1 + b1, 0.0)
    core = h @ w2 + b2
    return (core + xf) if pre_norm else _layer_norm(xf + core)


if __name__ == "__main__":
    key = jax.random.PRNGKey(0)
    kx, k1, k2, k3, k4 = jax.random.split(key, 5)

    ok = True

    # Case 1: small module-consistent shapes (single grid step).
    seq, batch, d_model, d_inner = 8, 2, 32, 64
    x = jax.random.normal(kx, (seq, batch, d_model), dtype=jnp.float32)
    w1 = jax.random.normal(k1, (d_model, d_inner), dtype=jnp.float32) * 0.05
    b1 = jax.random.normal(k2, (d_inner,), dtype=jnp.float32) * 0.05
    w2 = jax.random.normal(k3, (d_inner, d_model), dtype=jnp.float32) * 0.05
    b2 = jax.random.normal(k4, (d_model,), dtype=jnp.float32) * 0.05
    for pre_norm in (False, True):
        out = jax.block_until_ready(
            positionwise_feed_forward(x, w1, b1, w2, b2, pre_norm=pre_norm))
        ref = ffn_reference(x, w1, b1, w2, b2, pre_norm=pre_norm)
        if not jnp.allclose(out, ref, atol=1e-5, rtol=1e-5):
            ok = False
            print(f"case1 mismatch (pre_norm={pre_norm}):",
                  float(jnp.max(jnp.abs(out - ref))))

    # Case 2: exercises row padding (rows=36 -> 48) and the d_inner reduction
    # grid axis (tile_k=128 over d_inner=256), still modest sizes.
    seq, batch, d_model, d_inner = 12, 3, 128, 256
    x = jax.random.normal(kx, (seq, batch, d_model), dtype=jnp.float32)
    w1 = jax.random.normal(k1, (d_model, d_inner), dtype=jnp.float32) * 0.05
    b1 = jax.random.normal(k2, (d_inner,), dtype=jnp.float32) * 0.05
    w2 = jax.random.normal(k3, (d_inner, d_model), dtype=jnp.float32) * 0.05
    b2 = jax.random.normal(k4, (d_model,), dtype=jnp.float32) * 0.05
    for pre_norm in (False, True):
        out = jax.block_until_ready(
            positionwise_feed_forward(x, w1, b1, w2, b2, pre_norm=pre_norm,
                                      tile_rows=16, tile_k=128))
        ref = ffn_reference(x, w1, b1, w2, b2, pre_norm=pre_norm)
        if not jnp.allclose(out, ref, atol=1e-4, rtol=1e-4):
            ok = False
            print(f"case2 mismatch (pre_norm={pre_norm}):",
                  float(jnp.max(jnp.abs(out - ref))))

    if ok:
        print("KERNEL_OK")
</pallas_src>

<mosaic_0001>
module attributes {stable_mosaic.version = 11 : i64} {
  func.func @ffn_kernel(%arg0: i32, %arg1: i32, %arg2: memref<16x32xf32, #tpu.memory_space<vmem>>, %arg3: memref<32x64xf32, #tpu.memory_space<vmem>>, %arg4: memref<1x64xf32, #tpu.memory_space<vmem>>, %arg5: memref<64x32xf32, #tpu.memory_space<vmem>>, %arg6: memref<1x32xf32, #tpu.memory_space<vmem>>, %arg7: memref<16x32xf32, #tpu.memory_space<vmem>>, %arg8: memref<16x32xf32, #tpu.memory_space<vmem>>) attributes {dimension_semantics = [#tpu.dimension_semantics<parallel>, #tpu.dimension_semantics<arbitrary>], iteration_bounds = array<i64: 1, 1>, scalar_prefetch = 0 : i64, scratch_operands = 1 : i64, tpu.core_type = #tpu.core_type<tc>, window_params = [{transform_indices = @transform_0, window_bounds = array<i64: 16, 32>}, {transform_indices = @transform_1, window_bounds = array<i64: 32, 64>}, {transform_indices = @transform_2, window_bounds = array<i64: 1, 64>}, {transform_indices = @transform_3, window_bounds = array<i64: 64, 32>}, {pipeline_mode = #tpu.pipeline_mode<synchronous>, transform_indices = @transform_4, window_bounds = array<i64: 1, 32>}, {transform_indices = @transform_5, window_bounds = array<i64: 16, 32>}]} {
    %c0_i32 = arith.constant 0 : i32
    %0 = arith.cmpi eq, %arg1, %c0_i32 : i32
    %1 = arith.extui %0 : i1 to i32
    %c0_i32_0 = arith.constant 0 : i32
    %2 = arith.cmpi ne, %1, %c0_i32_0 : i32
    scf.if %2 {
      %cst_16 = arith.constant 0.000000e+00 : f32
      %19 = vector.broadcast %cst_16 : f32 to vector<16x32xf32>
      %c0_17 = arith.constant 0 : index
      %c0_18 = arith.constant 0 : index
      %20 = vector.load %arg8[%c0_17, %c0_18] : memref<16x32xf32, #tpu.memory_space<vmem>>, vector<16x32xf32>
      tpu.vector_store %arg8[%c0_17, %c0_18], %19 {strides = array<i32>} : memref<16x32xf32, #tpu.memory_space<vmem>>, vector<16x32xf32>,
    } else {
    }
    %c0 = arith.constant 0 : index
    %c0_1 = arith.constant 0 : index
    %3 = vector.load %arg2[%c0, %c0_1] : memref<16x32xf32, #tpu.memory_space<vmem>>, vector<16x32xf32>
    %c0_2 = arith.constant 0 : index
    %c0_3 = arith.constant 0 : index
    %4 = vector.load %arg3[%c0_2, %c0_3] : memref<32x64xf32, #tpu.memory_space<vmem>>, vector<32x64xf32>
    %cst = arith.constant dense<0.000000e+00> : vector<16x64xf32>
    %5 = tpu.matmul %3, %4, %cst {dimension_numbers = #tpu.dot_dimension_numbers<[1], [0], [0], [1], [0, 0, 1, 1], [], []>} : vector<16x32xf32>, vector<32x64xf32>, vector<16x64xf32> -> vector<16x64xf32>
    %c0_4 = arith.constant 0 : index
    %c0_5 = arith.constant 0 : index
    %6 = vector.load %arg4[%c0_4, %c0_5] : memref<1x64xf32, #tpu.memory_space<vmem>>, vector<1x64xf32>
    %7 = vector.broadcast %6 : vector<1x64xf32> to vector<16x64xf32>
    %8 = arith.addf %5, %7 : vector<16x64xf32>
    %cst_6 = arith.constant 0.000000e+00 : f32
    %9 = vector.broadcast %cst_6 : f32 to vector<16x64xf32>
    %10 = arith.maximumf %8, %9 : vector<16x64xf32>
    %c0_7 = arith.constant 0 : index
    %c0_8 = arith.constant 0 : index
    %11 = vector.load %arg8[%c0_7, %c0_8] : memref<16x32xf32, #tpu.memory_space<vmem>>, vector<16x32xf32>
    %c0_9 = arith.constant 0 : index
    %c0_10 = arith.constant 0 : index
    %12 = vector.load %arg5[%c0_9, %c0_10] : memref<64x32xf32, #tpu.memory_space<vmem>>, vector<64x32xf32>
    %cst_11 = arith.constant dense<0.000000e+00> : vector<16x32xf32>
    %13 = tpu.matmul %10, %12, %cst_11 {dimension_numbers = #tpu.dot_dimension_numbers<[1], [0], [0], [1], [0, 0, 1, 1], [], []>} : vector<16x64xf32>, vector<64x32xf32>, vector<16x32xf32> -> vector<16x32xf32>
    %14 = arith.addf %11, %13 : vector<16x32xf32>
    %c0_12 = arith.constant 0 : index
    %c0_13 = arith.constant 0 : index
    %15 = vector.load %arg8[%c0_12, %c0_13] : memref<16x32xf32, #tpu.memory_space<vmem>>, vector<16x32xf32>
    tpu.vector_store %arg8[%c0_12, %c0_13], %14 {strides = array<i32>} : memref<16x32xf32, #tpu.memory_space<vmem>>, vector<16x32xf32>,
    %c0_i32_14 = arith.constant 0 : i32
    %16 = arith.cmpi eq, %arg1, %c0_i32_14 : i32
    %17 = arith.extui %16 : i1 to i32
    %c0_i32_15 = arith.constant 0 : i32
    %18 = arith.cmpi ne, %17, %c0_i32_15 : i32
    scf.if %18 {
      %c0_16 = arith.constant 0 : index
      %c0_17 = arith.constant 0 : index
      %19 = vector.load %arg2[%c0_16, %c0_17] : memref<16x32xf32, #tpu.memory_space<vmem>>, vector<16x32xf32>
      %c0_18 = arith.constant 0 : index
      %c0_19 = arith.constant 0 : index
      %20 = vector.load %arg8[%c0_18, %c0_19] : memref<16x32xf32, #tpu.memory_space<vmem>>, vector<16x32xf32>
      %c0_20 = arith.constant 0 : index
      %c0_21 = arith.constant 0 : index
      %21 = vector.load %arg6[%c0_20, %c0_21] : memref<1x32xf32, #tpu.memory_space<vmem>>, vector<1x32xf32>
      %22 = vector.broadcast %21 : vector<1x32xf32> to vector<16x32xf32>
      %23 = arith.addf %20, %22 : vector<16x32xf32>
      %24 = arith.addf %19, %23 : vector<16x32xf32>
      %cst_22 = arith.constant dense<0.000000e+00> : vector<16xf32>
      %25 = vector.multi_reduction <add>, %24, %cst_22 [1] : vector<16x32xf32> to vector<16xf32>
      %26 = vector.shape_cast %25 : vector<16xf32> to vector<16x1xf32>
      %cst_23 = arith.constant 3.200000e+01 : f32
      %27 = vector.broadcast %cst_23 : f32 to vector<16x1xf32>
      %28 = arith.divf %26, %27 : vector<16x1xf32>
      %29 = arith.mulf %24, %24 : vector<16x32xf32>
      %cst_24 = arith.constant dense<0.000000e+00> : vector<16xf32>
      %30 = vector.multi_reduction <add>, %29, %cst_24 [1] : vector<16x32xf32> to vector<16xf32>
      %31 = vector.shape_cast %30 : vector<16xf32> to vector<16x1xf32>
      %cst_25 = arith.constant 3.200000e+01 : f32
      %32 = vector.broadcast %cst_25 : f32 to vector<16x1xf32>
      %33 = arith.divf %31, %32 : vector<16x1xf32>
      %34 = arith.mulf %28, %28 : vector<16x1xf32>
      %35 = arith.subf %33, %34 : vector<16x1xf32>
      %cst_26 = arith.constant 0.000000e+00 : f32
      %36 = vector.broadcast %cst_26 : f32 to vector<16x1xf32>
      %37 = arith.maximumf %35, %36 : vector<16x1xf32>
      %38 = vector.broadcast %28 : vector<16x1xf32> to vector<16x32xf32>
      %39 = arith.subf %24, %38 : vector<16x32xf32>
      %cst_27 = arith.constant 9.99999974E-6 : f32
      %40 = vector.broadcast %cst_27 : f32 to vector<16x1xf32>
      %41 = arith.addf %37, %40 : vector<16x1xf32>
      %42 = math.rsqrt %41 : vector<16x1xf32>
      %43 = vector.broadcast %42 : vector<16x1xf32> to vector<16x32xf32>
      %44 = arith.mulf %39, %43 : vector<16x32xf32>
      %c0_28 = arith.constant 0 : index
      %c0_29 = arith.constant 0 : index
      %45 = vector.load %arg7[%c0_28, %c0_29] : memref<16x32xf32, #tpu.memory_space<vmem>>, vector<16x32xf32>
      tpu.vector_store %arg7[%c0_28, %c0_29], %44 {strides = array<i32>} : memref<16x32xf32, #tpu.memory_space<vmem>>, vector<16x32xf32>,
    } else {
    }
    return
  }
  func.func @transform_0(%arg0: i32, %arg1: i32) -> (i32, i32) {
    %c0_i32 = arith.constant 0 : i32
    %c0_i32_0 = arith.constant 0 : i32
    return %arg0, %c0_i32 : i32, i32
  }
  func.func @transform_1(%arg0: i32, %arg1: i32) -> (i32, i32) {
    %c0_i32 = arith.constant 0 : i32
    %c0_i32_0 = arith.constant 0 : i32
    return %c0_i32, %arg1 : i32, i32
  }
  func.func @transform_2(%arg0: i32, %arg1: i32) -> (i32, i32) {
    %c0_i32 = arith.constant 0 : i32
    %c0_i32_0 = arith.constant 0 : i32
    return %c0_i32, %arg1 : i32, i32
  }
  func.func @transform_3(%arg0: i32, %arg1: i32) -> (i32, i32) {
    %c0_i32 = arith.constant 0 : i32
    %c0_i32_0 = arith.constant 0 : i32
    return %arg1, %c0_i32 : i32, i32
  }
  func.func @transform_4(%arg0: i32, %arg1: i32) -> (i32, i32) {
    %c0_i32 = arith.constant 0 : i32
    %c0_i32_0 = arith.constant 0 : i32
    %c0_i32_1 = arith.constant 0 : i32
    return %c0_i32, %c0_i32_0 : i32, i32
  }
  func.func @transform_5(%arg0: i32, %arg1: i32) -> (i32, i32) {
    %c0_i32 = arith.constant 0 : i32
    %c0_i32_0 = arith.constant 0 : i32
    return %arg0, %c0_i32 : i32, i32
  }
}

</mosaic_0001>

<llo_original>
// kernel: tpu_custom_call.1
$region0: #{tpu_custom_call.1}
  #allocation0 [shape = 'u32[]', space=smem, size = 0x4, offset = 0x4, fixed_abs, tag = 'smem constant byte address 0x4 - core index']
  #allocation1 [shape = 'u32[144,128]{1,0:T(1,128)}', space=vmem, size = 0x12000, scoped, tag = 'internal scratch']
  #allocation2 [shape = 'f32[16,32]{1,0:T(8,128)}', space=vmem, size = 0x2000, scoped, tag = 'scratch operand']
  %s0 = inlined_call_operand.vmem [shape: f32[16,32], index: 0, kind: input, shape index: {}]
  %s1 = inlined_call_operand.vmem [shape: f32[32,64], index: 1, kind: input, shape index: {}]
  %s2 = inlined_call_operand.vmem [shape: f32[1,64], index: 2, kind: input, shape index: {}]
  %s3 = inlined_call_operand.vmem [shape: f32[64,32], index: 3, kind: input, shape index: {}]
  %s4 = inlined_call_operand.vmem [shape: f32[1,32], index: 4, kind: input, shape index: {}]
  %s5 = inlined_call_operand.hbm [shape: f32[16,32], index: 5, kind: output, shape index: {}]
  %s6 = sld [smem:[#allocation0]]
  $region38: #{tpu_custom_call.1} parent=0
    _
  %s8 = ssub.s32 1, %s6
  %s9 = scalar_select 0, %s8, %s6
  $region1: #{tpu_custom_call.1} parent=0
    #allocation3 [shape = 'u8[8192]{0}', space=vmem, size = 0x2000, scoped, tag = 'output window, operand 0, single buffered']
    #allocation4 [shape = 's32[1]{0}', space=sflag, size = 0x4, scoped, tag = 'scoped memory for tpu_custom_call.1']
    %10 = vsyncpa [#allocation4], 0
    // Predicated region
    $region2: #{tpu_custom_call.1} parent=1 // pred_check
      _
    $region3: #{tpu_custom_call.1} parent=1 // pred_check_branch
      %12 = sbr.rel (0) target = $region5
    $region4: #{tpu_custom_call.1} parent=1 // pred_region
      _
    $region5: #{tpu_custom_call.1} parent=1 // pred_fallthru
      _
    // Predicated region
    $region6: #{tpu_custom_call.1} parent=1 // pred_check
      _
    $region7: #{tpu_custom_call.1} parent=1 // pred_check_branch
      %14 = sbr.rel (0) target = $region9
    $region8: #{tpu_custom_call.1} parent=1 // pred_region
      _
    $region9: #{tpu_custom_call.1} parent=1 // pred_fallthru
      _
    // Predicated region
    $region10: #{tpu_custom_call.1} parent=1 // pred_check
      _
    $region11: #{tpu_custom_call.1} parent=1 // pred_check_branch
      %16 = sbr.rel (0) target = $region13
    $region12: #{tpu_custom_call.1} parent=1 // pred_region
      _
    $region13: #{tpu_custom_call.1} parent=1 // pred_fallthru
      _
    // Predicated region
    $region14: #{tpu_custom_call.1} parent=1 // pred_check
      _
    $region15: #{tpu_custom_call.1} parent=1 // pred_check_branch
      %18 = sbr.rel (0) target = $region17
    $region16: #{tpu_custom_call.1} parent=1 // pred_region
      _
    $region17: #{tpu_custom_call.1} parent=1 // pred_fallthru
      _
    // Predicated region
    $region18: #{tpu_custom_call.1} parent=1 // pred_check
      _
    $region19: #{tpu_custom_call.1} parent=1 // pred_check_branch
      %20 = sbr.rel (0) target = $region21
    $region20: #{tpu_custom_call.1} parent=1 // pred_region
      _
    $region21: #{tpu_custom_call.1} parent=1 // pred_fallthru
      _
    %p21 = scmp.eq.s32.totalorder 0, 0
    // Predicated region
    $region22: #{tpu_custom_call.1} parent=1 // pred_check
      %p22 = pneg %p21
    $region23: #{tpu_custom_call.1} parent=1 // pred_check_branch
      %24 = sbr.rel (%p22) target = $region25
    $region24: #{tpu_custom_call.1} parent=1 // pred_region
      %vm25 = vcmask 261120
      %26 = vst.msk [vmem:[#allocation2] sm:$0xff] %vm25, 0.0
      %27 = vst.msk [vmem:[#allocation2 + $0x8] sm:$0xff] %vm25, 0.0
    $region25: #{tpu_custom_call.1} parent=1 // pred_fallthru
      _
    %v28 = vld [vmem:[%s0] sm:$0xff]
    %v29 = vld [vmem:[%s0 + $0x8] sm:$0xff]
    %v30 = vld [vmem:[%s1] sm:$0xff]
    %v31 = vld [vmem:[%s1 + $0x8] sm:$0xff]
    %v32 = vld [vmem:[%s1 + $0x10] sm:$0xff]
    %v33 = vld [vmem:[%s1 + $0x18] sm:$0xff]
    %v34 = vld [vmem:[%s2] sm:$0x1]
    %v36 = vlaneseq
    %v37 = vshrl.u32 %v36, 7
    %v38 = vsub.s32 0, %v37
    %v39 = vrot.slane %v34, %v38
    %vm41 = vcmask 261120
    %v43 = vsel %vm41, %v28, 0
    %v46 = vsel %vm41, %v29, 0
    %48 = vmatprep.subr.mxu0 0.0
    %49 = vmatpush1.msra.mxu0 %v30
    %50 = vmatprep.subr.mxu0 0.0
    %51 = vmatpush1.msra.mxu0 %v31
    %52 = vmatprep.subr.mxu0 0.0
    %53 = vmatpush1.msra.mxu0 %v32
    %54 = vmatprep.subr.mxu0 0.0
    %55 = vmatpush1.msra.mxu0 %v33
    %56 = vmatprep.subr.mxu0 0.0
    %57 = vmatpush1.msra.mxu0 0.0
    %58 = vmatprep.subr.mxu0 0.0
    %59 = vmatpush1.msra.mxu0 0.0
    %60 = vmatprep.subr.mxu0 0.0
    %61 = vmatpush1.msra.mxu0 0.0
    %62 = vmatprep.subr.mxu0 0.0
    %63 = vmatpush1.msra.mxu0 0.0
    %64 = vmatprep.subr.mxu0 0.0
    %65 = vmatpush1.msra.mxu0 0.0
    %66 = vmatprep.subr.mxu0 0.0
    %67 = vmatpush1.msra.mxu0 0.0
    %68 = vmatprep.subr.mxu0 0.0
    %69 = vmatpush1.msra.mxu0 0.0
    %70 = vmatprep.subr.mxu0 0.0
    %71 = vmatpush1.msra.mxu0 0.0
    %72 = vmatprep.subr.mxu0 0.0
    %73 = vmatpush1.msra.mxu0 0.0
    %74 = vmatprep.subr.mxu0 0.0
    %75 = vmatpush1.msra.mxu0 0.0
    %76 = vmatprep.subr.mxu0 0.0
    %77 = vmatpush1.msra.mxu0 0.0
    %78 = vmatprep.subr.mxu0 0.0
    %79 = vmatpush1.msra.mxu0 0.0
    %80 = vmatprep.subr.mxu0 0.0
    %81 = vmatpush1.msra.mxu0 0.0
    %82 = vmatprep.subr.mxu0 0.0
    %83 = vmatpush1.msra.mxu0 0.0
    %84 = vmatprep.subr.mxu0 0.0
    %85 = vmatpush1.msra.mxu0 0.0
    %86 = vmatprep.subr.mxu0 0.0
    %87 = vmatpush1.msra.mxu0 0.0
    %88 = vmatprep.subr.mxu0 0.0
    %89 = vmatpush1.msra.mxu0 0.0
    %90 = vmatprep.subr.mxu0 0.0
    %91 = vmatpush1.msra.mxu0 0.0
    %92 = vmatprep.subr.mxu0 0.0
    %93 = vmatpush1.msra.mxu0 0.0
    %94 = vmatprep.subr.mxu0 0.0
    %95 = vmatpush1.msra.mxu0 0.0
    %96 = vmatprep.subr.mxu0 0.0
    %97 = vmatpush1.msra.mxu0 0.0
    %98 = vmatprep.subr.mxu0 0.0
    %99 = vmatpush1.msra.mxu0 0.0
    %100 = vmatprep.subr.mxu0 0.0
    %101 = vmatpush1.msra.mxu0 0.0
    %102 = vmatprep.subr.mxu0 0.0
    %103 = vmatpush1.msra.mxu0 0.0
    %104 = vmatprep.subr.mxu0 0.0
    %105 = vmatpush1.msra.mxu0 0.0
    %106 = vmatprep.subr.mxu0 0.0
    %107 = vmatpush1.msra.mxu0 0.0
    %108 = vmatprep.subr.mxu0 0.0
    %109 = vmatpush1.msra.mxu0 0.0
    %110 = vmatprep.subr.mxu0 0.0
    %111 = vmatpush1.msra.mxu0 0.0
    %112 = vmatprep.mubr.f32.mxu0 0.0
    %113 = vmatmul.mubr.f32.gmra.mrb[0].mxu0 %v43
    %v114 = vpop.f32.mrb[0].mxu0
    %v115 = vadd.f32 %v39, %v114
    %v116 = vpop.f32.mrb[0].mxu0
    %117 = vmatprep.mubr.f32.mxu0 0.0
    %118 = vmatmul.mubr.f32.gmra.mrb[0].mxu0 %v46
    %v119 = vpop.f32.mrb[0].mxu0
    %v120 = vadd.f32 %v39, %v119
    %v121 = vpop.f32.mrb[0].mxu0
    %122 = vdwg.mxu0
    %v123 = vmax.f32 %v115, 0.0
    %v124 = vmax.f32 %v120, 0.0
    %v125 = vld [vmem:[#allocation2] sm:$0xff]
    %v126 = vld [vmem:[#allocation2 + $0x8] sm:$0xff]
    %v127 = vld [vmem:[%s3] sm:$0xff]
    %v128 = vld [vmem:[%s3 + $0x8] sm:$0xff]
    %v129 = vld [vmem:[%s3 + $0x10] sm:$0xff]
    %v130 = vld [vmem:[%s3 + $0x18] sm:$0xff]
    %v131 = vld [vmem:[%s3 + $0x20] sm:$0xff]
    %v132 = vld [vmem:[%s3 + $0x28] sm:$0xff]
    %v133 = vld [vmem:[%s3 + $0x30] sm:$0xff]
    %v134 = vld [vmem:[%s3 + $0x38] sm:$0xff]
    %vm135 = vcmask 523264
    %v137 = vsel %vm135, %v123, 0
    %v140 = vsel %vm135, %v124, 0
    %142 = vmatprep.subr.mxu0 0.0
    %143 = vmatpush1.msra.mxu0 %v127
    %144 = vmatprep.subr.mxu0 0.0
    %145 = vmatpush1.msra.mxu0 %v128
    %146 = vmatprep.subr.mxu0 0.0
    %147 = vmatpush1.msra.mxu0 %v129
    %148 = vmatprep.subr.mxu0 0.0
    %149 = vmatpush1.msra.mxu0 %v130
    %150 = vmatprep.subr.mxu0 0.0
    %151 = vmatpush1.msra.mxu0 %v131
    %152 = vmatprep.subr.mxu0 0.0
    %153 = vmatpush1.msra.mxu0 %v132
    %154 = vmatprep.subr.mxu0 0.0
    %155 = vmatpush1.msra.mxu0 %v133
    %156 = vmatprep.subr.mxu0 0.0
    %157 = vmatpush1.msra.mxu0 %v134
    %158 = vmatprep.subr.mxu0 0.0
    %159 = vmatpush1.msra.mxu0 0.0
    %160 = vmatprep.subr.mxu0 0.0
    %161 = vmatpush1.msra.mxu0 0.0
    %162 = vmatprep.subr.mxu0 0.0
    %163 = vmatpush1.msra.mxu0 0.0
    %164 = vmatprep.subr.mxu0 0.0
    %165 = vmatpush1.msra.mxu0 0.0
    %166 = vmatprep.subr.mxu0 0.0
    %167 = vmatpush1.msra.mxu0 0.0
    %168 = vmatprep.subr.mxu0 0.0
    %169 = vmatpush1.msra.mxu0 0.0
    %170 = vmatprep.subr.mxu0 0.0
    %171 = vmatpush1.msra.mxu0 0.0
    %172 = vmatprep.subr.mxu0 0.0
    %173 = vmatpush1.msra.mxu0 0.0
    %174 = vmatprep.subr.mxu0 0.0
    %175 = vmatpush1.msra.mxu0 0.0
    %176 = vmatprep.subr.mxu0 0.0
    %177 = vmatpush1.msra.mxu0 0.0
    %178 = vmatprep.subr.mxu0 0.0
    %179 = vmatpush1.msra.mxu0 0.0
    %180 = vmatprep.subr.mxu0 0.0
    %181 = vmatpush1.msra.mxu0 0.0
    %182 = vmatprep.subr.mxu0 0.0
    %183 = vmatpush1.msra.mxu0 0.0
    %184 = vmatprep.subr.mxu0 0.0
    %185 = vmatpush1.msra.mxu0 0.0
    %186 = vmatprep.subr.mxu0 0.0
    %187 = vmatpush1.msra.mxu0 0.0
    %188 = vmatprep.subr.mxu0 0.0
    %189 = vmatpush1.msra.mxu0 0.0
    %190 = vmatprep.subr.mxu0 0.0
    %191 = vmatpush1.msra.mxu0 0.0
    %192 = vmatprep.subr.mxu0 0.0
    %193 = vmatpush1.msra.mxu0 0.0
    %194 = vmatprep.subr.mxu0 0.0
    %195 = vmatpush1.msra.mxu0 0.0
    %196 = vmatprep.subr.mxu0 0.0
    %197 = vmatpush1.msra.mxu0 0.0
    %198 = vmatprep.subr.mxu0 0.0
    %199 = vmatpush1.msra.mxu0 0.0
    %200 = vmatprep.subr.mxu0 0.0
    %201 = vmatpush1.msra.mxu0 0.0
    %202 = vmatprep.subr.mxu0 0.0
    %203 = vmatpush1.msra.mxu0 0.0
    %204 = vmatprep.subr.mxu0 0.0
    %205 = vmatpush1.msra.mxu0 0.0
    %206 = vmatprep.mubr.f32.mxu0 0.0
    %207 = vmatmul.mubr.f32.gmra.mrb[0].mxu0 %v137
    %v208 = vpop.f32.mrb[0].mxu0
    %v209 = vadd.f32 0.0, %v208
    %v210 = vpop.f32.mrb[0].mxu0
    %211 = vmatprep.mubr.f32.mxu0 0.0
    %212 = vmatmul.mubr.f32.gmra.mrb[0].mxu0 %v140
    %v213 = vpop.f32.mrb[0].mxu0
    %v214 = vadd.f32 0.0, %v213
    %v215 = vpop.f32.mrb[0].mxu0
    %216 = vdwg.mxu0
    %v217 = vadd.f32 %v125, %v209
    %v218 = vadd.f32 %v126, %v214
    %219 = vst.msk [vmem:[#allocation2] sm:$0xff] %vm41, %v217
    %220 = vst.msk [vmem:[#allocation2 + $0x8] sm:$0xff] %vm41, %v218
    // Predicated region
    $region26: #{tpu_custom_call.1} parent=1 // pred_check
      %p221 = pneg %p21
    $region27: #{tpu_custom_call.1} parent=1 // pred_check_branch
      %223 = sbr.rel (%p221) target = $region29
    $region28: #{tpu_custom_call.1} parent=1 // pred_region
      %v224 = vld [vmem:[%s0] sm:$0xff]
      %v225 = vld [vmem:[%s0 + $0x8] sm:$0xff]
      %v226 = vld [vmem:[#allocation2] sm:$0xff]
      %v227 = vld [vmem:[#allocation2 + $0x8] sm:$0xff]
      %v228 = vld [vmem:[%s4] sm:$0x1]
      %v230 = vlaneseq
      %v231 = vshrl.u32 %v230, 7
      %v232 = vsub.s32 0, %v231
      %v233 = vrot.slane %v228, %v232
      %v235 = vadd.f32 %v226, %v233
      %v236 = vadd.f32 %v227, %v233
      %v237 = vadd.f32 %v224, %v235
      %v238 = vadd.f32 %v225, %v236
      %v239 = vsel %vm41, %v237, 0.0
      %240 = vadd.xlane.f32.xlu0 %v239
      %v241 = vpop.xlane.xlu0 %240
      %v242 = vsel %vm41, %v238, 0.0
      %243 = vadd.xlane.f32.xlu0 %v242
      %v244 = vpop.xlane.xlu0 %243
      %v245 = vrcp.pop 32.0
      %v246 = vmul.f32 %v241, %v245
      %v247 = vmul.f32 %v244, %v245
      %v248 = vmul.f32 %v237, %v237
      %v249 = vmul.f32 %v238, %v238
      %v250 = vsel %vm41, %v248, 0.0
      %251 = vadd.xlane.f32.xlu0 %v250
      %v252 = vpop.xlane.xlu0 %251
      %v253 = vsel %vm41, %v249, 0.0
      %254 = vadd.xlane.f32.xlu0 %v253
      %v255 = vpop.xlane.xlu0 %254
      %v256 = vmul.f32 %v252, %v245
      %v257 = vmul.f32 %v255, %v245
      %v258 = vmul.f32 %v246, %v246
      %v259 = vmul.f32 %v247, %v247
      %v260 = vsub.f32 %v256, %v258
      %v261 = vsub.f32 %v257, %v259
      %v262 = vmax.f32 %v260, 0.0
      %v263 = vmax.f32 %v261, 0.0
      %v264 = vsub.f32 %v237, %v246
      %v265 = vsub.f32 %v238, %v247
      %v266 = vadd.f32 %v262, 1e-05
      %v267 = vadd.f32 %v263, 1e-05
      %v268 = vrsqrt.pop %v266
      %v269 = vrsqrt.pop %v267
      %v270 = vmul.f32 %v264, %v268
      %v271 = vmul.f32 %v265, %v269
      %272 = vst.msk [vmem:[#allocation3] sm:$0xff] %vm41, %v270
      %273 = vst.msk [vmem:[#allocation3 + $0x8] sm:$0xff] %vm41, %v271
    $region29: #{tpu_custom_call.1} parent=1 // pred_fallthru
      _
    // Predicated region
    $region30: #{tpu_custom_call.1} parent=1 // pred_check
      _
    $region31: #{tpu_custom_call.1} parent=1 // pred_check_branch
      %275 = sbr.rel (0) target = $region33
    $region32: #{tpu_custom_call.1} parent=1 // pred_region
      %s277 = ssub.s32 256, 256
      %278 = vsyncadd [#allocation4], %s277
      %s279 = sshll.u32 [#allocation3], 4
      %s280 = int_to_ptr.vmem [resolvable:$true] %s279
      %285 = dma.vmem_to_hbm [thread:$0]  %s280, 256, %s5, [#allocation4], 128, 128, 8
    $region33: #{tpu_custom_call.1} parent=1 // pred_fallthru
      _
    // Predicated region
    $region34: #{tpu_custom_call.1} parent=1 // pred_check
      _
    $region35: #{tpu_custom_call.1} parent=1 // pred_check_branch
      %287 = sbr.rel (0) target = $region37
    $region36: #{tpu_custom_call.1} parent=1 // pred_region
      %288 = dma.done [#allocation4], 256
    $region37: #{tpu_custom_call.1} parent=1 // pred_fallthru
      _
    %289 = vsyncpa [#allocation4], 1

</llo_original>
